<compile_context>
chip_gen: v6e
topology: v6e:2x2x1
jax: 0.10.0
libtpu: 0.0.40
codegen_flags: <defaults>
</compile_context>

<pallas_src>
import functools

import jax
import jax.numpy as jnp
from jax import lax
from jax.experimental import pallas as pl
from jax.experimental.pallas import tpu as pltpu


def _round_up(x, m):
    return (x + m - 1) // m * m


def _supcon_kernel(contrast_ref, row_lab_ref, col_lab_ref, n_pos_ref, o_ref,
                   *, n_valid, inv_temp, loss_scale):
    """One row-tile of anchors against the full (resident) contrast set.

    contrast_ref : [N_pad, D_pad] bf16, raw features (zero rows past n_valid)
    row_lab_ref  : [TILE, 1]  int32 labels of this tile's anchors
    col_lab_ref  : [1, N_pad] int32 labels of all contrast columns (-1 = pad)
    n_pos_ref    : [TILE, 1]  f32 positive count per anchor (precomputed)
    o_ref        : [TILE, 1]  f32 per-anchor loss (0 for padded rows)
    """
    tile = o_ref.shape[0]
    n_pad = contrast_ref.shape[0]
    row0 = pl.multiple_of(pl.program_id(0) * tile, tile)

    # Anchor tile sliced from the resident contrast block (no second DMA
    # stream); 1/temperature folded into the small [TILE, D_pad] operand.
    a = contrast_ref[pl.ds(row0, tile), :] * inv_temp
    c = contrast_ref[...]

    # anchor . contrast^T on the MXU: contract dim 1 of both operands (native
    # transposed-RHS form, no in-kernel vxpose of the contrast block).
    scores = lax.dot_general(
        a, c, (((1,), (1,)), ((), ())), preferred_element_type=jnp.float32
    )                                                           # [TILE, N_pad] f32

    # Row max over ALL columns: padded columns score exactly 0, so this is
    # always >= the true max over valid columns; the shift cancels exactly.
    row_max = jnp.max(scores, axis=1, keepdims=True)
    logits = scores - row_max

    col = lax.broadcasted_iota(jnp.int32, (tile, n_pad), 1)
    row_g = lax.broadcasted_iota(jnp.int32, (tile, n_pad), 0) + row0
    logits_mask = jnp.logical_and(col < n_valid, row_g != col)  # drop self & padding

    # Denominator: sum of exp over non-self, non-padded columns.
    denom = jnp.sum(jnp.where(logits_mask, jnp.exp(logits), 0.0),
                    axis=1, keepdims=True)
    log_denom = jnp.log(denom)

    # Positive-pair mask built in-registers from labels (no N x N mask DMA).
    # valid_col is AND-ed in via logits_mask, so pad label -1 can never match.
    pos = jnp.logical_and(row_lab_ref[...] == col_lab_ref[...], logits_mask)
    sum_logits_pos = jnp.sum(jnp.where(pos, logits, 0.0), axis=1, keepdims=True)

    # mean_log_prob_pos = sum(pos*logits)/n_pos - log(denom).
    # Same zero-positive hazard as the PyTorch reference (0/0 -> NaN) on purpose.
    mlpp = sum_logits_pos / n_pos_ref[...] - log_denom
    loss = loss_scale * mlpp                                    # -(T/base_T) * mlpp

    row_valid = (lax.broadcasted_iota(jnp.int32, (tile, 1), 0) + row0) < n_valid
    o_ref[...] = jnp.where(row_valid, loss, 0.0)


def supcon_loss(features, labels=None, mask=None,
                temperature=0.07, base_temperature=0.07, row_tile=128):
    """JAX wrapper mirroring SupConLoss.forward with contrast_mode='all'."""
    if features.ndim < 3:
        raise ValueError("`features` needs to be [bsz, n_views, ...]")
    if features.ndim > 3:
        features = features.reshape(features.shape[0], features.shape[1], -1)
    bsz, n_views, dim = features.shape

    if labels is not None and mask is not None:
        raise ValueError("Cannot define both `labels` and `mask`")
    elif labels is None and mask is None:
        # eye(bsz) positive mask == label-equality with unique labels per sample.
        labels = jnp.arange(bsz, dtype=jnp.int32)
    elif labels is None:
        # TODO(synk): explicit [bsz, bsz] mask is not expressible as a label
        # compare; it would need the dense tiled mask streamed per row-tile.
        raise NotImplementedError("explicit `mask` input not supported by this kernel")
    labels = labels.reshape(-1).astype(jnp.int32)
    if labels.shape[0] != bsz:
        raise ValueError("Number of labels does not match number of features")

    n = n_views * bsz                       # number of anchors / contrasts
    # K = 128 already fills the v5e MXU; pad to 256 when dim > 128 so the
    # 256-deep v6e/v7x contraction is fully occupied.
    d_pad = 128 if dim <= 128 else _round_up(dim, 256)

    # Row tile: multiple of 16 (bf16 sublane packing, aligned dynamic slices);
    # ensure >= 2 tiles for n > 128 so both v7x TensorCores get work.
    tile = min(row_tile, _round_up(n, 16))
    if n > 128 and _round_up(n, tile) == tile:
        tile = _round_up(-(-n // 2), 16)
    n_pad = _round_up(n, tile)
    num_tiles = n_pad // tile
    # TODO(synk): for very large N on v7x (64 MiB VMEM) a column-tiled online
    # softmax (flash-style accumulators) would remove the [TILE, N_pad] temporaries.

    # contrast_feature = torch.cat(torch.unbind(features, dim=1), dim=0); bf16
    # operands for the MXU (softmax math stays f32 in-kernel).
    cf = jnp.transpose(features, (1, 0, 2)).reshape(n, dim).astype(jnp.bfloat16)
    cf = jnp.pad(cf, ((0, n_pad - n), (0, d_pad - dim)))

    lab_n = jnp.tile(labels, n_views)                           # [N] view-major
    lab_n = jnp.pad(lab_n, (0, n_pad - n), constant_values=-1)
    row_lab = lab_n.reshape(n_pad, 1)
    col_lab = lab_n.reshape(1, n_pad)

    # Positive count per anchor = (#same-label samples in batch)*n_views - 1.
    # O(bsz^2) int work in the wrapper replaces an O(N^2) in-kernel reduction.
    counts = jnp.sum((labels[:, None] == labels[None, :]).astype(jnp.int32), axis=1)
    n_pos = (counts * n_views - 1).astype(jnp.float32)
    n_pos = jnp.tile(n_pos, n_views)
    n_pos = jnp.pad(n_pos, (0, n_pad - n), constant_values=1.0).reshape(n_pad, 1)

    kernel = functools.partial(
        _supcon_kernel,
        n_valid=n,
        inv_temp=float(1.0 / temperature),
        loss_scale=float(-(temperature / base_temperature)),
    )

    # VMEM budget derived from the actual chip (v7x: 64 MiB, v5e/v6e: 128 MiB).
    try:
        vmem_cap = pltpu.get_tpu_info().vmem_capacity_bytes
    except Exception:
        vmem_cap = 64 * 1024 * 1024
    vmem_limit = min(int(vmem_cap * 0.75), 100 * 1024 * 1024)

    # Contrast block is DMA'd once (constant index_map, single-buffered).
    cost = pl.CostEstimate(
        flops=2 * n_pad * n_pad * d_pad,
        transcendentals=n_pad * n_pad + n_pad,
        bytes_accessed=n_pad * d_pad * 2 + 4 * n_pad * 4,
    )

    per_row = pl.pallas_call(
        kernel,
        out_shape=jax.ShapeDtypeStruct((n_pad, 1), jnp.float32),
        grid=(num_tiles,),
        in_specs=[
            pl.BlockSpec((n_pad, d_pad), lambda i: (0, 0),      # resident contrast set
                         pipeline_mode=pl.Buffered(1)),
            pl.BlockSpec((tile, 1), lambda i: (i, 0)),          # anchor labels
            pl.BlockSpec((1, n_pad), lambda i: (0, 0),          # contrast labels
                         pipeline_mode=pl.Buffered(1)),
            pl.BlockSpec((tile, 1), lambda i: (i, 0)),          # positive counts
        ],
        out_specs=pl.BlockSpec((tile, 1), lambda i: (i, 0)),
        compiler_params=pltpu.CompilerParams(
            dimension_semantics=("parallel",),                  # split tiles across TCs
            vmem_limit_bytes=vmem_limit,
        ),
        cost_estimate=cost,
    )(cf, row_lab, col_lab, n_pos)

    # mean over all (anchor_count * batch_size) anchors; padded rows contribute 0.
    return jnp.sum(per_row) / n


def _supcon_ref(features, labels=None, temperature=0.07, base_temperature=0.07):
    """Pure-JAX f32 reference (direct transcription of the PyTorch forward)."""
    bsz, n_views, dim = features.shape
    if labels is None:
        mask = jnp.eye(bsz, dtype=jnp.float32)
    else:
        labels = labels.reshape(-1, 1)
        mask = (labels == labels.T).astype(jnp.float32)
    cf = jnp.transpose(features, (1, 0, 2)).reshape(n_views * bsz, dim).astype(jnp.float32)
    adc = (cf @ cf.T) / temperature
    logits = adc - jnp.max(adc, axis=1, keepdims=True)
    mask = jnp.tile(mask, (n_views, n_views))
    n = n_views * bsz
    logits_mask = 1.0 - jnp.eye(n, dtype=jnp.float32)
    mask = mask * logits_mask
    exp_logits = jnp.exp(logits) * logits_mask
    log_prob = logits - jnp.log(exp_logits.sum(1, keepdims=True))
    mean_log_prob_pos = (mask * log_prob).sum(1) / mask.sum(1)
    loss = -(temperature / base_temperature) * mean_log_prob_pos
    return loss.reshape(n_views, bsz).mean()


if __name__ == "__main__":
    key = jax.random.PRNGKey(0)
    k1, k2 = jax.random.split(key)

    bsz, n_views, dim = 8, 2, 32
    features = jax.random.normal(k1, (bsz, n_views, dim), dtype=jnp.float32)
    # L2-normalize per view feature (typical SupCon usage; not required by module).
    features = features / jnp.linalg.norm(features, axis=-1, keepdims=True)
    labels = jax.random.randint(k2, (bsz,), 0, 3)   # duplicates => positives exist

    # Labels path (tolerance loosened for bf16 MXU operands; math is f32).
    loss = jax.block_until_ready(supcon_loss(features, labels=labels))
    ref = _supcon_ref(features, labels)
    assert jnp.isfinite(loss), loss
    assert jnp.allclose(loss, ref, rtol=5e-2, atol=1e-1), (loss, ref)

    # Default path (labels=None, mask=None -> eye positive mask).
    loss_eye = jax.block_until_ready(supcon_loss(features))
    ref_eye = _supcon_ref(features, None)
    assert jnp.isfinite(loss_eye), loss_eye
    assert jnp.allclose(loss_eye, ref_eye, rtol=5e-2, atol=1e-1), (loss_eye, ref_eye)

    print("KERNEL_OK")
</pallas_src>

<mosaic_0001>
module attributes {stable_mosaic.version = 11 : i64} {
  func.func @_supcon_kernel(%arg0: i32, %arg1: memref<16x128xbf16, #tpu.memory_space<vmem>>, %arg2: memref<16x1xi32, #tpu.memory_space<vmem>>, %arg3: memref<1x16xi32, #tpu.memory_space<vmem>>, %arg4: memref<16x1xf32, #tpu.memory_space<vmem>>, %arg5: memref<16x1xf32, #tpu.memory_space<vmem>>) attributes {dimension_semantics = [#tpu.dimension_semantics<parallel>], iteration_bounds = array<i64: 1>, scalar_prefetch = 0 : i64, scratch_operands = 0 : i64, tpu.core_type = #tpu.core_type<tc>, window_params = [{pipeline_mode = #tpu.pipeline_mode<synchronous>, transform_indices = @transform_0, window_bounds = array<i64: 16, 128>}, {transform_indices = @transform_1, window_bounds = array<i64: 16, 1>}, {pipeline_mode = #tpu.pipeline_mode<synchronous>, transform_indices = @transform_2, window_bounds = array<i64: 1, 16>}, {transform_indices = @transform_3, window_bounds = array<i64: 16, 1>}, {transform_indices = @transform_4, window_bounds = array<i64: 16, 1>}]} {
    %c16_i32 = arith.constant 16 : i32
    %0 = arith.muli %arg0, %c16_i32 : i32
    %1 = tpu.assume_multiple %0, 16 : i32
    %2 = arith.index_cast %1 : i32 to index
    %c0 = arith.constant 0 : index
    %3 = vector.load %arg1[%2, %c0] : memref<16x128xbf16, #tpu.memory_space<vmem>>, vector<16x128xbf16>
    %cst = arith.constant 1.431250e+01 : bf16
    %4 = vector.broadcast %cst : bf16 to vector<16x128xbf16>
    %5 = arith.mulf %3, %4 : vector<16x128xbf16>
    %c0_0 = arith.constant 0 : index
    %c0_1 = arith.constant 0 : index
    %6 = vector.load %arg1[%c0_0, %c0_1] : memref<16x128xbf16, #tpu.memory_space<vmem>>, vector<16x128xbf16>
    %cst_2 = arith.constant dense<0.000000e+00> : vector<16x16xf32>
    %7 = tpu.matmul %5, %6, %cst_2 {dimension_numbers = #tpu.dot_dimension_numbers<[1], [1], [0], [0], [0, 0, 1, 0], [], []>} : vector<16x128xbf16>, vector<16x128xbf16>, vector<16x16xf32> -> vector<16x16xf32>
    %cst_3 = arith.constant dense<0xFF800000> : vector<16xf32>
    %8 = vector.multi_reduction <maximumf>, %7, %cst_3 [1] : vector<16x16xf32> to vector<16xf32>
    %9 = vector.shape_cast %8 : vector<16xf32> to vector<16x1xf32>
    %10 = vector.broadcast %9 : vector<16x1xf32> to vector<16x16xf32>
    %11 = arith.subf %7, %10 : vector<16x16xf32>
    %12 = tpu.iota {dimensions = array<i32: 1>} : vector<16x16xi32>
    %13 = tpu.iota {dimensions = array<i32: 0>} : vector<16x16xi32>
    %14 = vector.broadcast %1 : i32 to vector<16x16xi32>
    %15 = arith.addi %13, %14 : vector<16x16xi32>
    %c16_i32_4 = arith.constant 16 : i32
    %16 = vector.broadcast %c16_i32_4 : i32 to vector<16x16xi32>
    %17 = arith.cmpi slt, %12, %16 : vector<16x16xi32>
    %18 = arith.cmpi ne, %15, %12 : vector<16x16xi32>
    %19 = arith.andi %17, %18 : vector<16x16xi1>
    %20 = math.exp %11 : vector<16x16xf32>
    %cst_5 = arith.constant 0.000000e+00 : f32
    %21 = vector.broadcast %cst_5 : f32 to vector<16x16xf32>
    %22 = arith.select %19, %20, %21 : vector<16x16xi1>, vector<16x16xf32>
    %cst_6 = arith.constant dense<0.000000e+00> : vector<16xf32>
    %23 = vector.multi_reduction <add>, %22, %cst_6 [1] : vector<16x16xf32> to vector<16xf32>
    %24 = vector.shape_cast %23 : vector<16xf32> to vector<16x1xf32>
    %25 = math.log %24 : vector<16x1xf32>
    %c0_7 = arith.constant 0 : index
    %c0_8 = arith.constant 0 : index
    %26 = vector.load %arg2[%c0_7, %c0_8] : memref<16x1xi32, #tpu.memory_space<vmem>>, vector<16x1xi32>
    %c0_9 = arith.constant 0 : index
    %c0_10 = arith.constant 0 : index
    %27 = vector.load %arg3[%c0_9, %c0_10] : memref<1x16xi32, #tpu.memory_space<vmem>>, vector<1x16xi32>
    %28 = vector.broadcast %26 : vector<16x1xi32> to vector<16x16xi32>
    %29 = vector.broadcast %27 : vector<1x16xi32> to vector<16x16xi32>
    %30 = arith.cmpi eq, %28, %29 : vector<16x16xi32>
    %31 = arith.andi %30, %19 : vector<16x16xi1>
    %cst_11 = arith.constant 0.000000e+00 : f32
    %32 = vector.broadcast %cst_11 : f32 to vector<16x16xf32>
    %33 = arith.select %31, %11, %32 : vector<16x16xi1>, vector<16x16xf32>
    %cst_12 = arith.constant dense<0.000000e+00> : vector<16xf32>
    %34 = vector.multi_reduction <add>, %33, %cst_12 [1] : vector<16x16xf32> to vector<16xf32>
    %35 = vector.shape_cast %34 : vector<16xf32> to vector<16x1xf32>
    %c0_13 = arith.constant 0 : index
    %c0_14 = arith.constant 0 : index
    %36 = vector.load %arg4[%c0_13, %c0_14] : memref<16x1xf32, #tpu.memory_space<vmem>>, vector<16x1xf32>
    %37 = arith.divf %35, %36 : vector<16x1xf32>
    %38 = arith.subf %37, %25 : vector<16x1xf32>
    %cst_15 = arith.constant -1.000000e+00 : f32
    %39 = vector.broadcast %cst_15 : f32 to vector<16x1xf32>
    %40 = arith.mulf %39, %38 : vector<16x1xf32>
    %41 = tpu.iota {dimensions = array<i32: 0>} : vector<16x1xi32>
    %42 = vector.broadcast %1 : i32 to vector<16x1xi32>
    %43 = arith.addi %41, %42 : vector<16x1xi32>
    %c16_i32_16 = arith.constant 16 : i32
    %44 = vector.broadcast %c16_i32_16 : i32 to vector<16x1xi32>
    %45 = arith.cmpi slt, %43, %44 : vector<16x1xi32>
    %cst_17 = arith.constant 0.000000e+00 : f32
    %46 = vector.broadcast %cst_17 : f32 to vector<16x1xf32>
    %47 = arith.select %45, %40, %46 : vector<16x1xi1>, vector<16x1xf32>
    %c0_18 = arith.constant 0 : index
    %c0_19 = arith.constant 0 : index
    %48 = vector.load %arg5[%c0_18, %c0_19] : memref<16x1xf32, #tpu.memory_space<vmem>>, vector<16x1xf32>
    tpu.vector_store %arg5[%c0_18, %c0_19], %47 {strides = array<i32>} : memref<16x1xf32, #tpu.memory_space<vmem>>, vector<16x1xf32>,
    return
  }
  func.func @transform_0(%arg0: i32) -> (i32, i32) {
    %c0_i32 = arith.constant 0 : i32
    %c0_i32_0 = arith.constant 0 : i32
    %c0_i32_1 = arith.constant 0 : i32
    return %c0_i32, %c0_i32_0 : i32, i32
  }
  func.func @transform_1(%arg0: i32) -> (i32, i32) {
    %c0_i32 = arith.constant 0 : i32
    %c0_i32_0 = arith.constant 0 : i32
    return %arg0, %c0_i32 : i32, i32
  }
  func.func @transform_2(%arg0: i32) -> (i32, i32) {
    %c0_i32 = arith.constant 0 : i32
    %c0_i32_0 = arith.constant 0 : i32
    %c0_i32_1 = arith.constant 0 : i32
    return %c0_i32, %c0_i32_0 : i32, i32
  }
  func.func @transform_3(%arg0: i32) -> (i32, i32) {
    %c0_i32 = arith.constant 0 : i32
    %c0_i32_0 = arith.constant 0 : i32
    return %arg0, %c0_i32 : i32, i32
  }
  func.func @transform_4(%arg0: i32) -> (i32, i32) {
    %c0_i32 = arith.constant 0 : i32
    %c0_i32_0 = arith.constant 0 : i32
    return %arg0, %c0_i32 : i32, i32
  }
}

</mosaic_0001>

<llo_original>
// kernel: tpu_custom_call.1
$region0: #{tpu_custom_call.1}
  #allocation0 [shape = 'u32[]', space=smem, size = 0x4, offset = 0x4, fixed_abs, tag = 'smem constant byte address 0x4 - core index']
  #allocation1 [shape = 'u32[144,128]{1,0:T(1,128)}', space=vmem, size = 0x12000, scoped, tag = 'internal scratch']
  %s0 = inlined_call_operand.vmem [shape: bf16[16,128], index: 0, kind: input, shape index: {}]
  %s1 = inlined_call_operand.vmem [shape: s32[16,1], index: 1, kind: input, shape index: {}]
  %s2 = inlined_call_operand.vmem [shape: s32[1,16], index: 2, kind: input, shape index: {}]
  %s3 = inlined_call_operand.vmem [shape: f32[16,1], index: 3, kind: input, shape index: {}]
  %s4 = inlined_call_operand.vmem [shape: f32[16,1], index: 4, kind: output, shape index: {}]
  %s5 = sld [smem:[#allocation0]]
  $region26: #{tpu_custom_call.1} parent=0
    _
  %s7 = ssub.s32 1, %s5
  %s8 = scalar_select 0, %s7, %s5
  // Predicated region
  $region2: #{tpu_custom_call.1} parent=0 // pred_check
    _
  $region3: #{tpu_custom_call.1} parent=0 // pred_check_branch
    %10 = sbr.rel (0) target = $region5
  $region4: #{tpu_custom_call.1} parent=0 // pred_region
    _
  $region5: #{tpu_custom_call.1} parent=0 // pred_fallthru
    _
  // Predicated region
  $region6: #{tpu_custom_call.1} parent=0 // pred_check
    _
  $region7: #{tpu_custom_call.1} parent=0 // pred_check_branch
    %12 = sbr.rel (0) target = $region9
  $region8: #{tpu_custom_call.1} parent=0 // pred_region
    _
  $region9: #{tpu_custom_call.1} parent=0 // pred_fallthru
    _
  // Predicated region
  $region10: #{tpu_custom_call.1} parent=0 // pred_check
    _
  $region11: #{tpu_custom_call.1} parent=0 // pred_check_branch
    %14 = sbr.rel (0) target = $region13
  $region12: #{tpu_custom_call.1} parent=0 // pred_region
    _
  $region13: #{tpu_custom_call.1} parent=0 // pred_fallthru
    _
  // Predicated region
  $region14: #{tpu_custom_call.1} parent=0 // pred_check
    _
  $region15: #{tpu_custom_call.1} parent=0 // pred_check_branch
    %16 = sbr.rel (0) target = $region17
  $region16: #{tpu_custom_call.1} parent=0 // pred_region
    _
  $region17: #{tpu_custom_call.1} parent=0 // pred_fallthru
    _
  %s19 = smul.u32 0, 16
  %s20 = sshra.s32 %s19, 3
  %s21 = sand.u32 %s19, 7
  %s22 = smul.addr %s20, 4
  %s23 = scalar_lea.vmem %s0, %s22
  %v24 = vld [vmem:[%s23] sm:$0xf]
  %v25 = vld [vmem:[%s23 + $0x4] sm:$0xf]
  %v26 = vmul.bf16 %v24, 1097154917
  %v27 = vmul.bf16 %v25, 1097154917
  %v28 = vld [vmem:[%s0] sm:$0xf]
  %v29 = vld [vmem:[%s0 + $0x4] sm:$0xf]
  %v32 = vunpack.c.l.b16 %v26
  %v33 = vunpack.c.l.b16 %v27
  %v34 = vpack.c.b16 %v33, %v32
  %v38 = vunpack.c.l.b16 %v28
  %v39 = vunpack.c.l.b16 %v29
  %v40 = vpack.c.b16 %v39, %v38
  %42 = vmatprep.subr.bf16.mxu0 0
  %43 = vmatpush1.bf16.xpose.msra.mxu0 0
  %44 = vmatprep.subr.bf16.mxu0 0
  %45 = vmatpush1.bf16.xpose.msra.mxu0 0
  %46 = vmatprep.subr.bf16.mxu0 0
  %47 = vmatpush1.bf16.xpose.msra.mxu0 0
  %48 = vmatprep.subr.bf16.mxu0 0
  %49 = vmatpush1.bf16.xpose.msra.mxu0 0
  %50 = vmatprep.subr.bf16.mxu0 0
  %51 = vmatpush1.bf16.xpose.msra.mxu0 0
  %52 = vmatprep.subr.bf16.mxu0 0
  %53 = vmatpush1.bf16.xpose.msra.mxu0 0
  %54 = vmatprep.subr.bf16.mxu0 0
  %55 = vmatpush1.bf16.xpose.msra.mxu0 0
  %56 = vmatprep.subr.bf16.mxu0 0
  %57 = vmatpush1.bf16.xpose.msra.mxu0 %v40
  %58 = vmatprep.subr.bf16.mxu0 0
  %59 = vmatpush2.bf16.xpose.msra.mxu0 0
  %60 = vmatprep.subr.bf16.mxu0 0
  %61 = vmatpush2.bf16.xpose.msra.mxu0 0
  %62 = vmatprep.subr.bf16.mxu0 0
  %63 = vmatpush2.bf16.xpose.msra.mxu0 0
  %64 = vmatprep.subr.bf16.mxu0 0
  %65 = vmatpush2.bf16.xpose.msra.mxu0 0
  %66 = vmatprep.subr.bf16.mxu0 0
  %67 = vmatpush2.bf16.xpose.msra.mxu0 0
  %68 = vmatprep.subr.bf16.mxu0 0
  %69 = vmatpush2.bf16.xpose.msra.mxu0 0
  %70 = vmatprep.subr.bf16.mxu0 0
  %71 = vmatpush2.bf16.xpose.msra.mxu0 0
  %72 = vmatprep.subr.bf16.mxu0 0
  %73 = vmatpush2.bf16.xpose.msra.mxu0 0
  %74 = vmatprep.mubr.bf16.mxu0 0
  %75 = vmatmul.mubr.bf16.gmra.mxu0 %v34
  %v76 = vpop.f32.mrf.mxu0
  %v77 = vadd.f32 0.0, %v76
  %v78 = vpop.f32.mrf.mxu0
  %v79 = vpop.f32.mrf.mxu0
  %v80 = vadd.f32 0.0, %v79
  %v81 = vpop.f32.mrf.mxu0
  %82 = vdwg.mxu0
  %vm83 = vcmask 130048
  %v84 = vsel %vm83, %v77, -inf
  %85 = vmax.xlane.f32.xlu0 %v84
  %v86 = vpop.xlane.xlu0 %85
  %v87 = vsel %vm83, %v80, -inf
  %88 = vmax.xlane.f32.xlu0 %v87
  %v89 = vpop.xlane.xlu0 %88
  %v90 = vsub.f32 %v77, %v86
  %v91 = vsub.f32 %v80, %v89
  %v92 = vlaneseq
  %v93 = vand.u32 %v92, 127
  %v94 = vlaneseq
  %v95 = vshrl.u32 %v94, 7
  %v96 = vadd.s32 %v95, 8
  %v97 = vstv %s19
  %v98 = vadd.s32 %v95, %v97
  %v99 = vadd.s32 %v96, %v97
  %vm100 = vcmp.lt.s32.totalorder %v93, 16
  %vm101 = vcmp.ne.s32.totalorder %v98, %v93
  %vm102 = vcmp.ne.s32.totalorder %v99, %v93
  %vm103 = vmand %vm100, %vm101
  %vm104 = vmand %vm100, %vm102
  %v105 = vmul.f32 %v90, 1.442695
  %v106 = vpow.pop %v105
  %v107 = vmul.f32 %v91, 1.442695
  %v108 = vpow.pop %v107
  %v109 = vsel %vm103, %v106, 0.0
  %v110 = vsel %vm104, %v108, 0.0
  %v111 = vsel %vm83, %v109, 0.0
  %112 = vadd.xlane.f32.xlu0 %v111
  %v113 = vpop.xlane.xlu0 %112
  %v114 = vsel %vm83, %v110, 0.0
  %115 = vadd.xlane.f32.xlu0 %v114
  %v116 = vpop.xlane.xlu0 %115
  %v117 = vlog2.pop %v113
  %v118 = vmul.f32 %v117, 0.6931472
  %v119 = vlog2.pop %v116
  %v120 = vmul.f32 %v119, 0.6931472
  %v121 = vld [vmem:[%s1] sm:$0xff]
  %v122 = vld [vmem:[%s1 + $0x8] sm:$0xff]
  %v123 = vld [vmem:[%s2] sm:$0x1]
  %124 = vset.pattern.permute.xlu0 0
  %125 = vperm.xlu0 %124, %v121
  %v126 = vpop.permute.xlu0 %125
  %127 = vset.pattern.permute.xlu0 0
  %128 = vperm.xlu0 %127, %v122
  %v129 = vpop.permute.xlu0 %128
  %v130 = vlaneseq
  %v131 = vshrl.u32 %v130, 7
  %v132 = vsub.s32 0, %v131
  %v133 = vrot.slane %v123, %v132
  %vm134 = vcmp.eq.s32.totalorder %v126, %v133
  %vm135 = vcmp.eq.s32.totalorder %v129, %v133
  %vm136 = vmand %vm134, %vm103
  %vm137 = vmand %vm135, %vm104
  %v138 = vsel %vm136, %v90, 0.0
  %v139 = vsel %vm137, %v91, 0.0
  %v140 = vsel %vm83, %v138, 0.0
  %141 = vadd.xlane.f32.xlu0 %v140
  %v142 = vpop.xlane.xlu0 %141
  %v143 = vsel %vm83, %v139, 0.0
  %144 = vadd.xlane.f32.xlu0 %v143
  %v145 = vpop.xlane.xlu0 %144
  %v146 = vld [vmem:[%s3] sm:$0xff]
  %v147 = vld [vmem:[%s3 + $0x8] sm:$0xff]
  %v148 = vrcp.pop %v146
  %v149 = vmul.f32 %v142, %v148
  %v150 = vrcp.pop %v147
  %v151 = vmul.f32 %v145, %v150
  %v152 = vsub.f32 %v149, %v118
  %v153 = vsub.f32 %v151, %v120
  %v154 = vmul.f32 %v152, -1.0
  %v155 = vmul.f32 %v153, -1.0
  %vm156 = vcmp.lt.s32.totalorder %v98, 16
  %vm157 = vcmp.lt.s32.totalorder %v99, 16
  %v158 = vsel %vm156, %v154, 0.0
  %v159 = vsel %vm157, %v155, 0.0
  %vm160 = vcmask 7168
  %161 = vst.msk [vmem:[%s4] sm:$0xff] %vm160, %v158
  %162 = vst.msk [vmem:[%s4 + $0x8] sm:$0xff] %vm160, %v159
  // Predicated region
  $region18: #{tpu_custom_call.1} parent=0 // pred_check
    _
  $region19: #{tpu_custom_call.1} parent=0 // pred_check_branch
    %164 = sbr.rel (0) target = $region21
  $region20: #{tpu_custom_call.1} parent=0 // pred_region
    _
  $region21: #{tpu_custom_call.1} parent=0 // pred_fallthru
    _
  // Predicated region
  $region22: #{tpu_custom_call.1} parent=0 // pred_check
    _
  $region23: #{tpu_custom_call.1} parent=0 // pred_check_branch
    %166 = sbr.rel (0) target = $region25
  $region24: #{tpu_custom_call.1} parent=0 // pred_region
    _
  $region25: #{tpu_custom_call.1} parent=0 // pred_fallthru
    _

</llo_original>
